<compile_context>
chip_gen: v7x
topology: tpu7x:2x2x1
jax: 0.10.0
libtpu: 0.0.40
codegen_flags: <defaults>
</compile_context>

<pallas_src>
import jax
import jax.numpy as jnp
from jax.experimental import pallas as pl
from jax.experimental.pallas import tpu as pltpu


# ----------------------------- Pallas kernel -----------------------------

def conv_bn_relu_kernel(p_ref, w_ref, b_ref, o_ref):
    # p_ref: (1, K, TM)    bf16 transposed im2col patches (one image, TM spatial cols)
    # w_ref: (Cout, K)     bf16 conv weights with BN scale folded in
    # b_ref: (Cout, 1)     f32 folded BN bias
    # o_ref: (1, Cout, TM) f32 output tile (lane-dense last dim)
    acc = jnp.dot(w_ref[...], p_ref[0], preferred_element_type=jnp.float32)
    o_ref[0] = jnp.maximum(acc + b_ref[...], 0.0).astype(o_ref.dtype)


def fused_conv_bn_relu(patches, w_fold, bias, *, tm_target=2048):
    # patches: (N, K, M_img) bf16 ; w_fold: (Cout, K) bf16 ; bias: (Cout, 1) f32
    N, K, M_img = patches.shape
    Cout = w_fold.shape[0]
    # Last block dim must be a multiple of 128 or the full extent; tm_target is a
    # multiple of 128, otherwise fall back to the full (small) extent.
    tm = M_img if M_img <= tm_target else tm_target
    grid = (N, pl.cdiv(M_img, tm))
    return pl.pallas_call(
        conv_bn_relu_kernel,
        out_shape=jax.ShapeDtypeStruct((N, Cout, M_img), jnp.float32),
        grid_spec=pltpu.PrefetchScalarGridSpec(
            num_scalar_prefetch=0,
            grid=grid,
            in_specs=[
                pl.BlockSpec((1, K, tm), lambda n, m: (n, 0, m)),
                pl.BlockSpec((Cout, K), lambda n, m: (0, 0)),
                pl.BlockSpec((Cout, 1), lambda n, m: (0, 0)),
            ],
            out_specs=pl.BlockSpec((1, Cout, tm), lambda n, m: (n, 0, m)),
        ),
        compiler_params=pltpu.CompilerParams(
            dimension_semantics=("parallel", "parallel"),
            vmem_limit_bytes=48 * 1024 * 1024,
        ),
    )(patches, w_fold, bias)


# ----------------------------- JAX glue -----------------------------

def im2col_transposed(x_nchw, kh, kw, stride, pad, dtype=jnp.bfloat16):
    """Transposed im2col slab from NCHW input: (N, kh*kw*C, OH*OW)."""
    x = jnp.pad(x_nchw, ((0, 0), (0, 0), (pad, pad), (pad, pad))).astype(dtype)
    N, C, H, W = x.shape
    oh = (H - kh) // stride + 1
    ow = (W - kw) // stride + 1
    cols = []
    for i in range(kh):
        for j in range(kw):
            cols.append(x[:, :, i:i + stride * oh:stride, j:j + stride * ow:stride])
    patches = jnp.stack(cols, axis=1)                      # (N, kh*kw, C, OH, OW)
    return patches.reshape(N, kh * kw * C, oh * ow), oh, ow


def feature_extractor_forward(x_nchw, conv_w, gamma, beta, run_mean, run_var,
                              eps=1e-5, tm_target=2048):
    """Equivalent of nn.Sequential(conv1, bn1(eval), relu) of ResNet18.

    x_nchw : (N, 3, H, W) float32
    conv_w : (64, 3, 7, 7) float32 (PyTorch layout: Cout, Cin, KH, KW)
    returns: (N, 64, H//2, W//2) float32 (NCHW, matching the PyTorch forward)
    """
    N, Cin, H, W = x_nchw.shape
    Cout, _, KH, KW = conv_w.shape
    stride, pad = 2, 3

    patches, OH, OW = im2col_transposed(x_nchw, KH, KW, stride, pad)   # (N, K, OH*OW) bf16

    # Fold eval-mode BatchNorm: scale into the weights, bias kept as a small f32 vector.
    scale = gamma / jnp.sqrt(run_var + eps)                            # (Cout,)
    w_mat = jnp.transpose(conv_w, (0, 2, 3, 1)).reshape(Cout, KH * KW * Cin)
    w_fold = (w_mat * scale[:, None]).astype(jnp.bfloat16)             # (Cout, K)
    bias = (beta - run_mean * scale).reshape(Cout, 1).astype(jnp.float32)

    out = fused_conv_bn_relu(patches, w_fold, bias, tm_target=tm_target)  # (N, Cout, OH*OW)
    return out.reshape(N, Cout, OH, OW)                                # pure reshape -> NCHW


# ----------------------------- reference (pure JAX, f32) -----------------------------

def reference_forward(x_nchw, conv_w, gamma, beta, run_mean, run_var, eps=1e-5):
    y = jax.lax.conv_general_dilated(
        x_nchw, conv_w, window_strides=(2, 2), padding=((3, 3), (3, 3)),
        dimension_numbers=("NCHW", "OIHW", "NCHW"))
    s = (gamma / jnp.sqrt(run_var + eps)).reshape(1, -1, 1, 1)
    b = (beta - run_mean * gamma / jnp.sqrt(run_var + eps)).reshape(1, -1, 1, 1)
    return jnp.maximum(y * s + b, 0.0)


# ----------------------------- main -----------------------------

if __name__ == "__main__":
    key = jax.random.PRNGKey(0)
    k_x, k_w, k_g, k_b, k_m, k_v = jax.random.split(key, 6)

    # Small shapes consistent with the module: RGB input, ResNet18 conv1/bn1 params.
    N, Cin, H, W = 2, 3, 16, 16
    Cout, KH, KW = 64, 7, 7

    x = jax.random.normal(k_x, (N, Cin, H, W), dtype=jnp.float32)

    # Deterministic synthetic parameters (no checkpoint load).
    conv_w = 0.05 * jax.random.normal(k_w, (Cout, Cin, KH, KW), dtype=jnp.float32)
    gamma = 1.0 + 0.1 * jax.random.normal(k_g, (Cout,), dtype=jnp.float32)
    beta = 0.1 * jax.random.normal(k_b, (Cout,), dtype=jnp.float32)
    run_mean = 0.1 * jax.random.normal(k_m, (Cout,), dtype=jnp.float32)
    run_var = jnp.abs(jax.random.normal(k_v, (Cout,), dtype=jnp.float32)) + 0.5

    out = feature_extractor_forward(x, conv_w, gamma, beta, run_mean, run_var)
    out = jax.block_until_ready(out)

    ref = jax.block_until_ready(
        reference_forward(x, conv_w, gamma, beta, run_mean, run_var))

    assert out.shape == (N, Cout, H // 2, W // 2), out.shape
    # bf16 inputs to the matmul (f32 accumulation) -> modest tolerance vs f32 reference.
    max_err = float(jnp.max(jnp.abs(out - ref)))
    assert jnp.allclose(out, ref, atol=5e-2, rtol=5e-2), max_err

    print("KERNEL_OK")
</pallas_src>

<mosaic_0001>
module attributes {stable_mosaic.version = 11 : i64} {
  func.func @conv_bn_relu_kernel(%arg0: i32, %arg1: i32, %arg2: memref<1x147x64xbf16, #tpu.memory_space<vmem>>, %arg3: memref<64x147xbf16, #tpu.memory_space<vmem>>, %arg4: memref<64x1xf32, #tpu.memory_space<vmem>>, %arg5: memref<1x64x64xf32, #tpu.memory_space<vmem>>) attributes {dimension_semantics = [#tpu.dimension_semantics<parallel>, #tpu.dimension_semantics<parallel>], iteration_bounds = array<i64: 2, 1>, scalar_prefetch = 0 : i64, scratch_operands = 0 : i64, tpu.core_type = #tpu.core_type<tc>, window_params = [{transform_indices = @transform_0, window_bounds = array<i64: 1, 147, 64>}, {pipeline_mode = #tpu.pipeline_mode<synchronous>, transform_indices = @transform_1, window_bounds = array<i64: 64, 147>}, {pipeline_mode = #tpu.pipeline_mode<synchronous>, transform_indices = @transform_2, window_bounds = array<i64: 64, 1>}, {transform_indices = @transform_3, window_bounds = array<i64: 1, 64, 64>}]} {
    %c0 = arith.constant 0 : index
    %c0_0 = arith.constant 0 : index
    %0 = vector.load %arg3[%c0, %c0_0] : memref<64x147xbf16, #tpu.memory_space<vmem>>, vector<64x147xbf16>
    %c0_1 = arith.constant 0 : index
    %c0_2 = arith.constant 0 : index
    %c0_3 = arith.constant 0 : index
    %1 = vector.load %arg2[%c0_1, %c0_2, %c0_3] : memref<1x147x64xbf16, #tpu.memory_space<vmem>>, vector<1x147x64xbf16>
    %2 = vector.shape_cast %1 : vector<1x147x64xbf16> to vector<147x64xbf16>
    %cst = arith.constant dense<0.000000e+00> : vector<64x64xf32>
    %3 = tpu.matmul %0, %2, %cst {dimension_numbers = #tpu.dot_dimension_numbers<[1], [0], [0], [1], [0, 0, 1, 1], [], []>} : vector<64x147xbf16>, vector<147x64xbf16>, vector<64x64xf32> -> vector<64x64xf32>
    %c0_4 = arith.constant 0 : index
    %c0_5 = arith.constant 0 : index
    %4 = vector.load %arg4[%c0_4, %c0_5] : memref<64x1xf32, #tpu.memory_space<vmem>>, vector<64x1xf32>
    %5 = vector.broadcast %4 : vector<64x1xf32> to vector<64x64xf32>
    %6 = arith.addf %3, %5 : vector<64x64xf32>
    %cst_6 = arith.constant 0.000000e+00 : f32
    %7 = vector.broadcast %cst_6 : f32 to vector<64x64xf32>
    %8 = arith.maximumf %6, %7 : vector<64x64xf32>
    %c0_7 = arith.constant 0 : index
    %c0_8 = arith.constant 0 : index
    %c0_9 = arith.constant 0 : index
    %9 = vector.load %arg5[%c0_7, %c0_8, %c0_9] : memref<1x64x64xf32, #tpu.memory_space<vmem>>, vector<1x64x64xf32>
    %10 = vector.shape_cast %9 : vector<1x64x64xf32> to vector<64x64xf32>
    %11 = vector.shape_cast %8 : vector<64x64xf32> to vector<1x64x64xf32>
    tpu.vector_store %arg5[%c0_7, %c0_8, %c0_9], %11 {strides = array<i32>} : memref<1x64x64xf32, #tpu.memory_space<vmem>>, vector<1x64x64xf32>,
    return
  }
  func.func @transform_0(%arg0: i32, %arg1: i32) -> (i32, i32, i32) {
    %c0_i32 = arith.constant 0 : i32
    %c0_i32_0 = arith.constant 0 : i32
    return %arg0, %c0_i32, %arg1 : i32, i32, i32
  }
  func.func @transform_1(%arg0: i32, %arg1: i32) -> (i32, i32) {
    %c0_i32 = arith.constant 0 : i32
    %c0_i32_0 = arith.constant 0 : i32
    %c0_i32_1 = arith.constant 0 : i32
    return %c0_i32, %c0_i32_0 : i32, i32
  }
  func.func @transform_2(%arg0: i32, %arg1: i32) -> (i32, i32) {
    %c0_i32 = arith.constant 0 : i32
    %c0_i32_0 = arith.constant 0 : i32
    %c0_i32_1 = arith.constant 0 : i32
    return %c0_i32, %c0_i32_0 : i32, i32
  }
  func.func @transform_3(%arg0: i32, %arg1: i32) -> (i32, i32, i32) {
    %c0_i32 = arith.constant 0 : i32
    %c0_i32_0 = arith.constant 0 : i32
    return %arg0, %c0_i32, %arg1 : i32, i32, i32
  }
}

</mosaic_0001>

<llo_original>
// kernel: tpu_custom_call.1
$region0: #{tpu_custom_call.1}
  #allocation0 [shape = 'u32[]', space=smem, size = 0x4, offset = 0x4, fixed_abs, tag = 'smem constant byte address 0x4 - core index']
  #allocation1 [shape = 'u32[144,128]{1,0:T(1,128)}', space=vmem, size = 0x12000, scoped, tag = 'internal scratch']
  %s0 = inlined_call_operand.vmem [shape: bf16[2,147,64], index: 0, kind: input, shape index: {}]
  %s1 = inlined_call_operand.vmem [shape: bf16[64,147], index: 1, kind: input, shape index: {}]
  %s2 = inlined_call_operand.vmem [shape: f32[64,1], index: 2, kind: input, shape index: {}]
  %s3 = inlined_call_operand.hbm [shape: f32[2,64,64], index: 3, kind: output, shape index: {}]
  %s4 = sld [smem:[#allocation0]]
  $region45: #{tpu_custom_call.1} parent=0
    _
  %s6 = ssub.s32 1, %s4
  %s7 = scalar_select 0, %s6, %s4
  $region1: #{tpu_custom_call.1} parent=0
    #allocation2 [shape = 'u8[65536]{0}', space=vmem, size = 0x10000, scoped, tag = 'output window, operand 0']
    #allocation3 [shape = 's32[2]{0}', space=sflag, size = 0x8, scoped, tag = 'scoped memory for tpu_custom_call.1']
    %8 = vsyncpa [#allocation3], 0
    %s9 = scalar_lea.sflag [#allocation3], 1
    %10 = vsyncpa %s9, 0
    loop: start=0, step=1, limit=4
    $region2: #{tpu_custom_call.1} parent=1 // loop_pre_header
      _
    $region3: #{tpu_custom_call.1} parent=1 // loop_header
      %s12 = sphi 0, %s16
      %p13 = scmp.ge.s32.totalorder %s12, 4
      %s19 = sphi 0, %s31
      %s20 = sphi 0, %s27
      %s21 = sphi 0, %s19
      %s22 = sphi 0, %s20
      %s23 = sphi 0, %s21
      %s24 = sphi 0, %s22
      %s36 = sphi 0, %s38
      %s39 = sphi 0, %s36
      %s40 = sphi 0, %s39
      %s56 = sphi 0, %s40
      %s60 = sphi 0, %s60
      %s62 = sphi 0, %s60
      %s63 = sphi 0, %s62
      %s77 = sphi 0, %s63
      %s81 = sphi 0, %s81
      %s83 = sphi 0, %s81
      %s84 = sphi 0, %s83
      %s98 = sphi 0, %s84
      %s106 = sphi 0, %s108
      %s109 = sphi 0, %s106
      %s110 = sphi 0, %s109
      %s126 = sphi 0, %s110
    $region4: #{tpu_custom_call.1} parent=1 // loop_header_branch
      %15 = sbr.rel (%p13) target = $region8
    $region5: #{tpu_custom_call.1} parent=1 // loop_body
      %s17 = ssub.s32 %s12, 1
      %s18 = ssub.s32 %s12, 2
      %s25 = sadd.s32 1, %s20
      %p26 = scmp.ge.s32.totalorder %s25, 1
      %s27 = scalar_select %p26, 0, %s25
      %s28 = sadd.s32 1, %s19
      %s29 = scalar_select %p26, %s28, %s19
      %p30 = scmp.ge.s32.totalorder %s29, 2
      %s31 = scalar_select %p30, 0, %s29
      %s32 = ssub.s32 %s19, %s31
      %s33 = ssub.s32 %s20, %s27
      %s34 = sor.u32 %s32, %s33
      %p35 = scmp.eq.s32.totalorder %s34, 0
      %s37 = sadd.s32 %s36, 1
      %s38 = scalar_select %p35, %s36, %s37
      %p41 = pneg %p35
      %p42 = scmp.eq.s32.totalorder %s12, 1
      %p43 = por %p41, %p42
      %p44 = scmp.ne.s32.totalorder %s36, %s39
      %p45 = scmp.eq.s32.totalorder %s12, 0
      %p46 = por %p44, %p45
      %p47 = scmp.ne.s32.totalorder %s36, %s39
      %p48 = scmp.eq.s32.totalorder %s17, 1
      %p49 = por %p47, %p48
      %p50 = scmp.ne.s32.totalorder %s39, %s40
      %p51 = scmp.eq.s32.totalorder %s17, 0
      %p52 = por %p50, %p51
      %p53 = scmp.ne.s32.totalorder %s39, %s40
      %p54 = scmp.eq.s32.totalorder %s18, 1
      %p55 = por %p53, %p54
      %p57 = scmp.ne.s32.totalorder %s40, %s56
      %p58 = scmp.eq.s32.totalorder %s18, 0
      %p59 = por %p57, %p58
      %s61 = sadd.s32 %s60, 1
      %p64 = scmp.eq.s32.totalorder %s12, 1
      %p65 = scmp.ne.s32.totalorder %s60, %s62
      %p66 = scmp.eq.s32.totalorder %s12, 0
      %p67 = por %p65, %p66
      %p68 = scmp.ne.s32.totalorder %s60, %s62
      %p69 = scmp.eq.s32.totalorder %s17, 1
      %p70 = por %p68, %p69
      %p71 = scmp.ne.s32.totalorder %s62, %s63
      %p72 = scmp.eq.s32.totalorder %s17, 0
      %p73 = por %p71, %p72
      %p74 = scmp.ne.s32.totalorder %s62, %s63
      %p75 = scmp.eq.s32.totalorder %s18, 1
      %p76 = por %p74, %p75
      %p78 = scmp.ne.s32.totalorder %s63, %s77
      %p79 = scmp.eq.s32.totalorder %s18, 0
      %p80 = por %p78, %p79
      %s82 = sadd.s32 %s81, 1
      %p85 = scmp.eq.s32.totalorder %s12, 1
      %p86 = scmp.ne.s32.totalorder %s81, %s83
      %p87 = scmp.eq.s32.totalorder %s12, 0
      %p88 = por %p86, %p87
      %p89 = scmp.ne.s32.totalorder %s81, %s83
      %p90 = scmp.eq.s32.totalorder %s17, 1
      %p91 = por %p89, %p90
      %p92 = scmp.ne.s32.totalorder %s83, %s84
      %p93 = scmp.eq.s32.totalorder %s17, 0
      %p94 = por %p92, %p93
      %p95 = scmp.ne.s32.totalorder %s83, %s84
      %p96 = scmp.eq.s32.totalorder %s18, 1
      %p97 = por %p95, %p96
      %p99 = scmp.ne.s32.totalorder %s84, %s98
      %p100 = scmp.eq.s32.totalorder %s18, 0
      %p101 = por %p99, %p100
      %s102 = ssub.s32 %s19, %s31
      %s103 = ssub.s32 %s20, %s27
      %s104 = sor.u32 %s102, %s103
      %p105 = scmp.eq.s32.totalorder %s104, 0
      %s107 = sadd.s32 %s106, 1
      %s108 = scalar_select %p105, %s106, %s107
      %p111 = pneg %p105
      %p112 = scmp.eq.s32.totalorder %s12, 1
      %p113 = por %p111, %p112
      %p114 = scmp.ne.s32.totalorder %s106, %s109
      %p115 = scmp.eq.s32.totalorder %s12, 0
      %p116 = por %p114, %p115
      %p117 = scmp.ne.s32.totalorder %s106, %s109
      %p118 = scmp.eq.s32.totalorder %s17, 1
      %p119 = por %p117, %p118
      %p120 = scmp.ne.s32.totalorder %s109, %s110
      %p121 = scmp.eq.s32.totalorder %s17, 0
      %p122 = por %p120, %p121
      %p123 = scmp.ne.s32.totalorder %s109, %s110
      %p124 = scmp.eq.s32.totalorder %s18, 1
      %p125 = por %p123, %p124
      %p127 = scmp.ne.s32.totalorder %s110, %s126
      %p128 = scmp.eq.s32.totalorder %s18, 0
      %p129 = por %p127, %p128
      %p130 = scmp.le.s32.totalorder 1, %s12
      %p131 = scmp.lt.s32.totalorder %s12, 3
      %p132 = pnand %p130, %p131
      %p133 = pneg %p132
      // Predicated region
      $region9: #{tpu_custom_call.1} parent=5 // pred_check
        _
      $region10: #{tpu_custom_call.1} parent=5 // pred_check_branch
        %135 = sbr.rel (%p132) target = $region12
      $region11: #{tpu_custom_call.1} parent=5 // pred_region
        %s136 = ssub.s32 %s12, 1
        // Predicated region
        $region13: #{tpu_custom_call.1} parent=11 // pred_check
          %p137 = pneg %p73
        $region14: #{tpu_custom_call.1} parent=11 // pred_check_branch
          %139 = sbr.rel (%p137) target = $region16
        $region15: #{tpu_custom_call.1} parent=11 // pred_region
          _
        $region16: #{tpu_custom_call.1} parent=11 // pred_fallthru
          _
        // Predicated region
        $region17: #{tpu_custom_call.1} parent=11 // pred_check
          %p140 = pneg %p94
        $region18: #{tpu_custom_call.1} parent=11 // pred_check_branch
          %142 = sbr.rel (%p140) target = $region20
        $region19: #{tpu_custom_call.1} parent=11 // pred_region
          _
        $region20: #{tpu_custom_call.1} parent=11 // pred_fallthru
          _
      $region12: #{tpu_custom_call.1} parent=5 // pred_fallthru
        _
      %p143 = scmp.lt.s32.totalorder %s12, 2
      // Predicated region
      $region21: #{tpu_custom_call.1} parent=5 // pred_check
        %p144 = pneg %p143
      $region22: #{tpu_custom_call.1} parent=5 // pred_check_branch
        %146 = sbr.rel (%p144) target = $region24
      $region23: #{tpu_custom_call.1} parent=5 // pred_region
        // Predicated region
        $region25: #{tpu_custom_call.1} parent=23 // pred_check
          %p147 = pneg %p46
        $region26: #{tpu_custom_call.1} parent=23 // pred_check_branch
          %149 = sbr.rel (%p147) target = $region28
        $region27: #{tpu_custom_call.1} parent=23 // pred_region
          %p150 = scmp.lt.s32.totalorder %s19, 1
          %s151 = scalar_select %p150, %s19, 1
          %p152 = scmp.lt.s32.totalorder %s20, 0
          %s153 = scalar_select %p152, %s20, 0
          %s154 = smul.addr %s151, 19
          %s155 = sadd.s32 %s153, %s154
          %s156 = smul.addr %s155, 4
          %s157 = scalar_lea.vmem %s0, %s156
        $region28: #{tpu_custom_call.1} parent=23 // pred_fallthru
          _
      $region24: #{tpu_custom_call.1} parent=5 // pred_fallthru
        _
      %p158 = scmp.le.s32.totalorder 1, %s12
      %p159 = scmp.lt.s32.totalorder %s12, 3
      %p160 = pnand %p158, %p159
      %p161 = pneg %p160
      // Predicated region
      $region29: #{tpu_custom_call.1} parent=5 // pred_check
        _
      $region30: #{tpu_custom_call.1} parent=5 // pred_check_branch
        %163 = sbr.rel (%p160) target = $region32
      $region31: #{tpu_custom_call.1} parent=5 // pred_region
        %s164 = ssub.s32 %s12, 1
        %p165 = scmp.lt.s32.totalorder %s21, 1
        %s166 = scalar_select %p165, %s21, 1
        %p167 = scmp.lt.s32.totalorder %s22, 0
        %s168 = scalar_select %p167, %s22, 0
        %s169 = smul.addr %s166, 19
        %s170 = sadd.s32 %s168, %s169
        %s171 = smul.addr %s170, 4
        %s172 = scalar_lea.vmem %s0, %s171
        %p173 = pneg %p52
        %p174 = pneg %p49
        %p175 = pneg %p73
        %p176 = pneg %p70
        %p177 = pneg %p94
        %p178 = pneg %p91
        %p179 = pneg %p122
        %p180 = pneg %p119
        %s181 = sand.u32 %s109, 1
        %s182 = scalar_lea.sflag [#allocation3], %s181
        %s183 = sand.u32 %s109, 1
        %s184 = smul.addr %s183, 64
        %s185 = scalar_lea.vmem [#allocation2], %s184
        %p186 = scmp.lt.s32.totalorder %s21, 1
        %s187 = scalar_select %p186, %s21, 1
        %p188 = scmp.lt.s32.totalorder %s22, 0
        %s189 = scalar_select %p188, %s22, 0
        %s190 = smul.addr %s187, 19
        %s191 = sadd.s32 %s189, %s190
        %s192 = smul.addr %s191, 4
        %s193 = scalar_lea.vmem %s0, %s192
        %v195 = vld [vmem:[%s1] sm:$0xff]
        %v196 = vld [vmem:[%s1 + $0x8] sm:$0xff]
        %v197 = vld [vmem:[%s1 + $0x10] sm:$0xff]
        %v198 = vld [vmem:[%s1 + $0x18] sm:$0xff]
        %v199 = vld [vmem:[%s1 + $0x20] sm:$0xff]
        %v200 = vld [vmem:[%s1 + $0x28] sm:$0xff]
        %v201 = vld [vmem:[%s1 + $0x30] sm:$0xff]
        %v202 = vld [vmem:[%s1 + $0x38] sm:$0xff]
        %v203 = vld [vmem:[%s193] sm:$0xf]
        %v204 = vld [vmem:[%s193 + $0x4] sm:$0xf]
        %v205 = vld [vmem:[%s193 + $0x8] sm:$0xf]
        %v206 = vld [vmem:[%s193 + $0xc] sm:$0xf]
        %v207 = vld [vmem:[%s193 + $0x10] sm:$0xf]
        %v208 = vld [vmem:[%s193 + $0x14] sm:$0xf]
        %v209 = vld [vmem:[%s193 + $0x18] sm:$0xf]
        %v210 = vld [vmem:[%s193 + $0x1c] sm:$0xf]
        %v211 = vld [vmem:[%s193 + $0x20] sm:$0xf]
        %v212 = vld [vmem:[%s193 + $0x24] sm:$0xf]
        %v213 = vld [vmem:[%s193 + $0x28] sm:$0xf]
        %v214 = vld [vmem:[%s193 + $0x2c] sm:$0xf]
        %v215 = vld [vmem:[%s193 + $0x30] sm:$0xf]
        %v216 = vld [vmem:[%s193 + $0x34] sm:$0xf]
        %v217 = vld [vmem:[%s193 + $0x38] sm:$0xf]
        %v218 = vld [vmem:[%s193 + $0x3c] sm:$0xf]
        %v219 = vld [vmem:[%s193 + $0x40] sm:$0xf]
        %v220 = vld [vmem:[%s193 + $0x44] sm:$0xf]
        %v221 = vld [vmem:[%s193 + $0x48] sm:$0x3]
        %v222 = vld [vmem:[%s2] sm:$0xff]
        %v223 = vld [vmem:[%s2 + $0x8] sm:$0xff]
        %v224 = vld [vmem:[%s2 + $0x10] sm:$0xff]
        %v225 = vld [vmem:[%s2 + $0x18] sm:$0xff]
        %v226 = vld [vmem:[%s2 + $0x20] sm:$0xff]
        %v227 = vld [vmem:[%s2 + $0x28] sm:$0xff]
        %v228 = vld [vmem:[%s2 + $0x30] sm:$0xff]
        %v229 = vld [vmem:[%s2 + $0x38] sm:$0xff]
        %231 = vset.pattern.permute.xlu0 0
        %232 = vperm.xlu0 %231, %v222
        %v233 = vpop.permute.xlu0 %232
        %236 = vset.pattern.permute.xlu0 0
        %237 = vperm.xlu0 %236, %v223
        %v238 = vpop.permute.xlu0 %237
        %241 = vset.pattern.permute.xlu0 0
        %242 = vperm.xlu0 %241, %v224
        %v243 = vpop.permute.xlu0 %242
        %246 = vset.pattern.permute.xlu0 0
        %247 = vperm.xlu0 %246, %v225
        %v248 = vpop.permute.xlu0 %247
        %251 = vset.pattern.permute.xlu0 0
        %252 = vperm.xlu0 %251, %v226
        %v253 = vpop.permute.xlu0 %252
        %256 = vset.pattern.permute.xlu0 0
        %257 = vperm.xlu0 %256, %v227
        %v258 = vpop.permute.xlu0 %257
        %261 = vset.pattern.permute.xlu0 0
        %262 = vperm.xlu0 %261, %v228
        %v263 = vpop.permute.xlu0 %262
        %266 = vset.pattern.permute.xlu0 0
        %267 = vperm.xlu0 %266, %v229
        %v268 = vpop.permute.xlu0 %267
        %v278 = vunpack.c.l.b16 %v195
        %v279 = vunpack.c.h.b16 %v195
        %v280 = vunpack.c.l.b16 %v196
        %v281 = vunpack.c.h.b16 %v196
        %v282 = vunpack.c.l.b16 %v197
        %v283 = vunpack.c.h.b16 %v197
        %v284 = vunpack.c.l.b16 %v198
        %v285 = vunpack.c.h.b16 %v198
        %v286 = vunpack.c.l.b16 %v199
        %v287 = vunpack.c.h.b16 %v199
        %v288 = vunpack.c.l.b16 %v200
        %v289 = vunpack.c.h.b16 %v200
        %v290 = vunpack.c.l.b16 %v201
        %v291 = vunpack.c.h.b16 %v201
        %v292 = vunpack.c.l.b16 %v202
        %v293 = vunpack.c.h.b16 %v202
        %v294 = vpack.c.b16 %v280, %v278
        %v295 = vpack.c.b16 %v281, %v279
        %v296 = vpack.c.b16 %v284, %v282
        %v297 = vpack.c.b16 %v285, %v283
        %v298 = vpack.c.b16 %v288, %v286
        %v299 = vpack.c.b16 %v289, %v287
        %v300 = vpack.c.b16 %v292, %v290
        %v301 = vpack.c.b16 %v293, %v291
        %v325 = vunpack.c.l.b16 %v203
        %v326 = vunpack.c.l.b16 %v204
        %v327 = vunpack.c.l.b16 %v205
        %v328 = vunpack.c.l.b16 %v206
        %v329 = vunpack.c.l.b16 %v207
        %v330 = vunpack.c.l.b16 %v208
        %v331 = vunpack.c.l.b16 %v209
        %v332 = vunpack.c.l.b16 %v210
        %v333 = vunpack.c.l.b16 %v211
        %v334 = vunpack.c.l.b16 %v212
        %v335 = vunpack.c.l.b16 %v213
        %v336 = vunpack.c.l.b16 %v214
        %v337 = vunpack.c.l.b16 %v215
        %v338 = vunpack.c.l.b16 %v216
        %v339 = vunpack.c.l.b16 %v217
        %v340 = vunpack.c.l.b16 %v218
        %v341 = vunpack.c.l.b16 %v219
        %v342 = vunpack.c.l.b16 %v220
        %v343 = vunpack.c.l.b16 %v221
        %v344 = vpack.c.b16 %v326, %v325
        %v345 = vpack.c.b16 %v328, %v327
        %v346 = vpack.c.b16 %v330, %v329
        %v347 = vpack.c.b16 %v332, %v331
        %v348 = vpack.c.b16 %v334, %v333
        %v349 = vpack.c.b16 %v336, %v335
        %v350 = vpack.c.b16 %v338, %v337
        %v351 = vpack.c.b16 %v340, %v339
        %v352 = vpack.c.b16 %v342, %v341
        %v353 = vpack.c.b16 %v343, %v343
        %vm363 = vcmask 154624
        %v365 = vsel %vm363, %v295, 0
        %v368 = vsel %vm363, %v297, 0
        %v371 = vsel %vm363, %v299, 0
        %v374 = vsel %vm363, %v301, 0
        %vm376 = vcmask 1040384
        %vm377 = vcmask 1041408
        %v378 = vsel %vm376, 4294967295, 65535
        %v379 = vsel %vm377, %v378, 0
        %v381 = vand.u32 %v353, %v379
        %383 = vmatprep.subr.bf16.mxu0 0
        %384 = vmatpush1.bf16.msra.mxu0 %v344
        %385 = vmatprep.subr.bf16.mxu0 0
        %386 = vmatpush1.bf16.msra.mxu0 %v345
        %387 = vmatprep.subr.bf16.mxu0 0
        %388 = vmatpush1.bf16.msra.mxu0 %v346
        %389 = vmatprep.subr.bf16.mxu0 0
        %390 = vmatpush1.bf16.msra.mxu0 %v347
        %391 = vmatprep.subr.bf16.mxu0 0
        %392 = vmatpush1.bf16.msra.mxu0 %v348
        %393 = vmatprep.subr.bf16.mxu0 0
        %394 = vmatpush1.bf16.msra.mxu0 %v349
        %395 = vmatprep.subr.bf16.mxu0 0
        %396 = vmatpush1.bf16.msra.mxu0 %v350
        %397 = vmatprep.subr.bf16.mxu0 0
        %398 = vmatpush1.bf16.msra.mxu0 %v351
        %399 = vmatprep.subr.bf16.mxu0 0
        %400 = vmatpush1.bf16.msra.mxu0 %v352
        %401 = vmatprep.subr.bf16.mxu0 0
        %402 = vmatpush1.bf16.msra.mxu0 %v381
        %403 = vmatprep.subr.bf16.mxu0 0
        %404 = vmatpush1.bf16.msra.mxu0 0
        %405 = vmatprep.subr.bf16.mxu0 0
        %406 = vmatpush1.bf16.msra.mxu0 0
        %407 = vmatprep.subr.bf16.mxu0 0
        %408 = vmatpush1.bf16.msra.mxu0 0
        %409 = vmatprep.subr.bf16.mxu0 0
        %410 = vmatpush1.bf16.msra.mxu0 0
        %411 = vmatprep.subr.bf16.mxu0 0
        %412 = vmatpush1.bf16.msra.mxu0 0
        %413 = vmatprep.subr.bf16.mxu0 0
        %414 = vmatpush1.bf16.msra.mxu0 0
        %415 = vmatprep.mubr.bf16.mxu0 %v365
        %416 = vmatmul.mubr.bf16.gmra.mrb[0].mxu0 %v294
        %v417 = vpop.f32.mrb[0].mxu0
        %v418 = vadd.f32 %v233, %v417
        %v419 = vpop.f32.mrb[0].mxu0
        %v420 = vpop.f32.mrb[0].mxu0
        %v421 = vadd.f32 %v238, %v420
        %v422 = vpop.f32.mrb[0].mxu0
        %423 = vmatprep.mubr.bf16.mxu0 %v368
        %424 = vmatmul.mubr.bf16.gmra.mrb[0].mxu0 %v296
        %v425 = vpop.f32.mrb[0].mxu0
        %v426 = vadd.f32 %v243, %v425
        %v427 = vpop.f32.mrb[0].mxu0
        %v428 = vpop.f32.mrb[0].mxu0
        %v429 = vadd.f32 %v248, %v428
        %v430 = vpop.f32.mrb[0].mxu0
        %431 = vmatprep.mubr.bf16.mxu0 %v371
        %432 = vmatmul.mubr.bf16.gmra.mrb[0].mxu0 %v298
        %v433 = vpop.f32.mrb[0].mxu0
        %v434 = vadd.f32 %v253, %v433
        %v435 = vpop.f32.mrb[0].mxu0
        %v436 = vpop.f32.mrb[0].mxu0
        %v437 = vadd.f32 %v258, %v436
        %v438 = vpop.f32.mrb[0].mxu0
        %439 = vmatprep.mubr.bf16.mxu0 %v374
        %440 = vmatmul.mubr.bf16.gmra.mrb[0].mxu0 %v300
        %v441 = vpop.f32.mrb[0].mxu0
        %v442 = vadd.f32 %v263, %v441
        %v443 = vpop.f32.mrb[0].mxu0
        %v444 = vpop.f32.mrb[0].mxu0
        %v445 = vadd.f32 %v268, %v444
        %v446 = vpop.f32.mrb[0].mxu0
        %447 = vdwg.mxu0
        %v448 = vmax.f32 %v418, 0.0
        %v449 = vmax.f32 %v421, 0.0
        %v450 = vmax.f32 %v426, 0.0
        %v451 = vmax.f32 %v429, 0.0
        %v452 = vmax.f32 %v434, 0.0
        %v453 = vmax.f32 %v437, 0.0
        %v454 = vmax.f32 %v442, 0.0
        %v455 = vmax.f32 %v445, 0.0
        %vm456 = vcmask 523264
        %457 = vst.msk [vmem:[%s185] sm:$0xff] %vm456, %v448
        %458 = vst.msk [vmem:[%s185 + $0x8] sm:$0xff] %vm456, %v449
        %459 = vst.msk [vmem:[%s185 + $0x10] sm:$0xff] %vm456, %v450
        %460 = vst.msk [vmem:[%s185 + $0x18] sm:$0xff] %vm456, %v451
        %461 = vst.msk [vmem:[%s185 + $0x20] sm:$0xff] %vm456, %v452
        %462 = vst.msk [vmem:[%s185 + $0x28] sm:$0xff] %vm456, %v453
        %463 = vst.msk [vmem:[%s185 + $0x30] sm:$0xff] %vm456, %v454
        %464 = vst.msk [vmem:[%s185 + $0x38] sm:$0xff] %vm456, %v455
        %s465 = sand.u32 %s109, 1
        %s466 = scalar_lea.sflag [#allocation3], %s465
        %s467 = sand.u32 %s109, 1
        %s468 = smul.addr %s467, 64
        %s469 = scalar_lea.vmem [#allocation2], %s468
        // Predicated region
        $region33: #{tpu_custom_call.1} parent=31 // pred_check
          %p470 = pneg %p119
        $region34: #{tpu_custom_call.1} parent=31 // pred_check_branch
          %472 = sbr.rel (%p470) target = $region36
        $region35: #{tpu_custom_call.1} parent=31 // pred_region
          %s474 = ssub.s32 1024, 1024
          %475 = vsyncadd %s466, %s474
          %s476 = smul.addr %s21, 8
          %s477 = sadd.s32 %s22, %s476
          %s478 = smul.addr %s477, 128
          %s479 = scalar_lea.hbm %s3, %s478
          %s480 = sshll.u32 %s469, 4
          %s481 = int_to_ptr.vmem [resolvable:$true] %s480
          %486 = dma.vmem_to_hbm [thread:$0]  %s481, 1024, %s479, %s466, 128, 128, 8
        $region36: #{tpu_custom_call.1} parent=31 // pred_fallthru
          _
      $region32: #{tpu_custom_call.1} parent=5 // pred_fallthru
        _
      %p487 = scmp.le.s32.totalorder 2, %s12
      // Predicated region
      $region37: #{tpu_custom_call.1} parent=5 // pred_check
        %p488 = pneg %p487
      $region38: #{tpu_custom_call.1} parent=5 // pred_check_branch
        %490 = sbr.rel (%p488) target = $region40
      $region39: #{tpu_custom_call.1} parent=5 // pred_region
        %s491 = ssub.s32 %s12, 2
        // Predicated region
        $region41: #{tpu_custom_call.1} parent=39 // pred_check
          %p492 = pneg %p125
        $region42: #{tpu_custom_call.1} parent=39 // pred_check_branch
          %494 = sbr.rel (%p492) target = $region44
        $region43: #{tpu_custom_call.1} parent=39 // pred_region
          %s495 = sand.u32 %s110, 1
          %s496 = scalar_lea.sflag [#allocation3], %s495
          %s497 = sand.u32 %s110, 1
          %s498 = smul.addr %s497, 64
          %s499 = scalar_lea.vmem [#allocation2], %s498
          %500 = dma.done %s496, 1024
        $region44: #{tpu_custom_call.1} parent=39 // pred_fallthru
          _
      $region40: #{tpu_custom_call.1} parent=5 // pred_fallthru
        _
    $region6: #{tpu_custom_call.1} parent=1 // loop_footer
      %s16 = sadd.s32 1, %s12
    $region7: #{tpu_custom_call.1} parent=1 // loop_footer_branch
      %11 = sbr.rel target = $region3
    $region8: #{tpu_custom_call.1} parent=1 // loop_exit
      _
    %501 = vsyncpa [#allocation3], 1
    %s502 = scalar_lea.sflag [#allocation3], 1
    %503 = vsyncpa %s502, 1

</llo_original>
